<compile_context>
chip_gen: v7x
topology: tpu7x:2x2x1
jax: 0.10.0
libtpu: 0.0.40
codegen_flags: <defaults>
</compile_context>

<pallas_src>
import jax
import jax.numpy as jnp
from jax.experimental import pallas as pl
from jax.experimental.pallas import tpu as pltpu

EPS = 1e-10
_LANE = 128


def _l2norm_kernel(x_ref, w_ref, o_ref):
    # x_ref: (NB, C, LBLK)   w_ref: (1, C, 1)   o_ref: (NB, C, LBLK)
    x = x_ref[...].astype(jnp.float32)
    # Channel (sublane-axis) reduction; lanes stay independent, so masked
    # edge-block lanes can never leak into valid columns.
    ssq = jnp.sum(x * x, axis=1, keepdims=True)            # (NB, 1, LBLK)
    # eps after sqrt, exactly like the reference; one exact reciprocal per
    # column replaces the (C x HW)-wide divide.
    inv = pl.reciprocal(jnp.sqrt(ssq) + EPS, approx=False)  # (NB, 1, LBLK)
    w = w_ref[...].astype(jnp.float32)                      # (1, C, 1)
    o_ref[...] = ((x * inv) * w).astype(o_ref.dtype)


def _max_block_elems(itemsize):
    """Padded per-block element budget from the per-generation scoped-VMEM default."""
    try:
        kind = jax.devices()[0].device_kind.lower()
    except Exception:
        kind = ""
    if "v5 lite" in kind or "v5e" in kind or "v5litepod" in kind:
        vmem_target = 12 * 1024 * 1024      # v5e: 16 MiB scoped-VMEM default
    else:
        vmem_target = 24 * 1024 * 1024      # v6e / v7x: 32 MiB scoped default
    # 2 double-buffered input + 2 output buffers in the I/O dtype, plus ~2
    # f32-sized in-kernel temporaries per block element.
    bytes_per_elem = 4 * itemsize + 2 * 4
    return max(_LANE, vmem_target // bytes_per_elem)


def _choose_tiling(N, C, HW, itemsize):
    # Sublane packing: 8 rows for f32, 16 for bf16, 32 for int8/fp8.  A C
    # smaller than the packing still occupies `sub_pack` sublanes in VMEM.
    sub_pack = max(8, 32 // itemsize)
    padded_c = pl.cdiv(C, sub_pack) * sub_pack
    budget = _max_block_elems(itemsize)

    # Fold the whole batch into the block when even a single 128-lane chunk of
    # all N samples fits the budget (fewer fixed-overhead grid steps).
    min_lblk = min(HW, _LANE)
    nb = N if N * padded_c * min_lblk <= budget else 1

    max_lblk = max(_LANE, budget // (nb * padded_c))
    if HW <= max_lblk:
        lblk = HW                                   # full extent: no 128 constraint
    else:
        lblk = (max_lblk // _LANE) * _LANE          # multiple of 128 (masked edge ok)
        if lblk >= 8 * _LANE:                       # prefer (8*128)-dense chunks
            lblk = (lblk // (8 * _LANE)) * (8 * _LANE)

    n_batch_tiles = N // nb
    n_lane_tiles = pl.cdiv(HW, lblk)

    # Guarantee >= 2 grid steps when a 128-aligned split exists: v7x has two
    # TensorCores and a (1, 1) grid would idle half its HBM bandwidth.
    if n_batch_tiles * n_lane_tiles == 1 and HW >= 2 * _LANE:
        lblk = pl.cdiv(pl.cdiv(HW, 2), _LANE) * _LANE
        n_lane_tiles = pl.cdiv(HW, lblk)

    return nb, lblk, n_batch_tiles, n_lane_tiles


def l2norm(x, weight):
    """x: (N, C, H, W), weight: (C,) -> (N, C, H, W), same dtype as x."""
    N, C, H, W = x.shape
    HW = H * W
    itemsize = jnp.dtype(x.dtype).itemsize

    nb, lblk, n_batch_tiles, n_lane_tiles = _choose_tiling(N, C, HW, itemsize)

    # Free reshapes (metadata only): no host-side pad on input, no slice on
    # output -- Pallas masks the partial last lane-block itself.
    x3 = x.reshape(N, C, HW)
    w3 = weight.reshape(1, C, 1).astype(jnp.float32)

    out = pl.pallas_call(
        _l2norm_kernel,
        out_shape=jax.ShapeDtypeStruct((N, C, HW), x.dtype),
        grid=(n_batch_tiles, n_lane_tiles),
        in_specs=[
            pl.BlockSpec((nb, C, lblk), lambda b, s: (b, 0, s)),
            # Constant index_map -> weight block stays resident across steps.
            pl.BlockSpec((1, C, 1), lambda b, s: (0, 0, 0)),
        ],
        out_specs=pl.BlockSpec((nb, C, lblk), lambda b, s: (b, 0, s)),
        compiler_params=pltpu.CompilerParams(
            dimension_semantics=("parallel", "parallel"),
        ),
    )(x3, w3)

    return out.reshape(N, C, H, W)


def l2norm_reference(x, weight):
    norm = jnp.sqrt(jnp.sum(x * x, axis=1, keepdims=True)) + EPS
    return weight[None, :, None, None] * (x / norm)


if __name__ == "__main__":
    # Module config: n_channels=4, scale(gamma)=20 -> weight initialized to 20.
    N, C, H, W = 2, 4, 16, 16
    gamma = 20.0

    key = jax.random.PRNGKey(0)
    x = jax.random.normal(key, (N, C, H, W), dtype=jnp.float32)
    weight = jnp.full((C,), gamma, dtype=jnp.float32)  # constant init, like reset_parameters

    out = jax.block_until_ready(l2norm(x, weight))

    ref = l2norm_reference(x, weight)
    assert out.shape == (N, C, H, W)
    assert jnp.allclose(out, ref, atol=1e-5, rtol=1e-5), "mismatch vs reference"

    print("KERNEL_OK")
</pallas_src>

<mosaic_0001>
module attributes {stable_mosaic.version = 11 : i64} {
  func.func @_l2norm_kernel(%arg0: i32, %arg1: i32, %arg2: memref<2x4x128xf32, #tpu.memory_space<vmem>>, %arg3: memref<1x4x1xf32, #tpu.memory_space<vmem>>, %arg4: memref<2x4x128xf32, #tpu.memory_space<vmem>>) attributes {dimension_semantics = [#tpu.dimension_semantics<parallel>, #tpu.dimension_semantics<parallel>], iteration_bounds = array<i64: 1, 2>, scalar_prefetch = 0 : i64, scratch_operands = 0 : i64, tpu.core_type = #tpu.core_type<tc>, window_params = [{transform_indices = @transform_0, window_bounds = array<i64: 2, 4, 128>}, {pipeline_mode = #tpu.pipeline_mode<synchronous>, transform_indices = @transform_1, window_bounds = array<i64: 1, 4, 1>}, {transform_indices = @transform_2, window_bounds = array<i64: 2, 4, 128>}]} {
    %c0 = arith.constant 0 : index
    %c0_0 = arith.constant 0 : index
    %c0_1 = arith.constant 0 : index
    %0 = vector.load %arg2[%c0, %c0_0, %c0_1] : memref<2x4x128xf32, #tpu.memory_space<vmem>>, vector<2x4x128xf32>
    %1 = arith.mulf %0, %0 : vector<2x4x128xf32>
    %cst = arith.constant dense<0.000000e+00> : vector<2x128xf32>
    %2 = vector.multi_reduction <add>, %1, %cst [1] : vector<2x4x128xf32> to vector<2x128xf32>
    %3 = vector.shape_cast %2 : vector<2x128xf32> to vector<2x1x128xf32>
    %4 = math.sqrt %3 : vector<2x1x128xf32>
    %cst_2 = arith.constant 1.000000e-10 : f32
    %5 = vector.broadcast %cst_2 : f32 to vector<2x1x128xf32>
    %6 = arith.addf %4, %5 : vector<2x1x128xf32>
    %7 = tpu.reciprocal %6 : vector<2x1x128xf32> -> vector<2x1x128xf32>
    %c0_3 = arith.constant 0 : index
    %c0_4 = arith.constant 0 : index
    %c0_5 = arith.constant 0 : index
    %8 = vector.load %arg3[%c0_3, %c0_4, %c0_5] : memref<1x4x1xf32, #tpu.memory_space<vmem>>, vector<1x4x1xf32>
    %9 = vector.broadcast %7 : vector<2x1x128xf32> to vector<2x4x128xf32>
    %10 = arith.mulf %0, %9 : vector<2x4x128xf32>
    %11 = vector.broadcast %8 : vector<1x4x1xf32> to vector<2x4x128xf32>
    %12 = arith.mulf %10, %11 : vector<2x4x128xf32>
    %c0_6 = arith.constant 0 : index
    %c0_7 = arith.constant 0 : index
    %c0_8 = arith.constant 0 : index
    %13 = vector.load %arg4[%c0_6, %c0_7, %c0_8] : memref<2x4x128xf32, #tpu.memory_space<vmem>>, vector<2x4x128xf32>
    tpu.vector_store %arg4[%c0_6, %c0_7, %c0_8], %12 {strides = array<i32>} : memref<2x4x128xf32, #tpu.memory_space<vmem>>, vector<2x4x128xf32>,
    return
  }
  func.func @transform_0(%arg0: i32, %arg1: i32) -> (i32, i32, i32) {
    %c0_i32 = arith.constant 0 : i32
    %c0_i32_0 = arith.constant 0 : i32
    return %arg0, %c0_i32, %arg1 : i32, i32, i32
  }
  func.func @transform_1(%arg0: i32, %arg1: i32) -> (i32, i32, i32) {
    %c0_i32 = arith.constant 0 : i32
    %c0_i32_0 = arith.constant 0 : i32
    %c0_i32_1 = arith.constant 0 : i32
    %c0_i32_2 = arith.constant 0 : i32
    return %c0_i32, %c0_i32_0, %c0_i32_1 : i32, i32, i32
  }
  func.func @transform_2(%arg0: i32, %arg1: i32) -> (i32, i32, i32) {
    %c0_i32 = arith.constant 0 : i32
    %c0_i32_0 = arith.constant 0 : i32
    return %arg0, %c0_i32, %arg1 : i32, i32, i32
  }
}

</mosaic_0001>

<llo_original>
// kernel: tpu_custom_call.1
$region0: #{tpu_custom_call.1}
  #allocation0 [shape = 'u32[]', space=smem, size = 0x4, offset = 0x4, fixed_abs, tag = 'smem constant byte address 0x4 - core index']
  #allocation1 [shape = 'u32[144,128]{1,0:T(1,128)}', space=vmem, size = 0x12000, scoped, tag = 'internal scratch']
  %s0 = inlined_call_operand.hbm [shape: f32[2,4,256], index: 0, kind: input, shape index: {}]
  %s1 = inlined_call_operand.vmem [shape: f32[1,4,1], index: 1, kind: input, shape index: {}]
  %s2 = inlined_call_operand.hbm [shape: f32[2,4,256], index: 2, kind: output, shape index: {}]
  %s3 = sld [smem:[#allocation0]]
  $region45: #{tpu_custom_call.1} parent=0
    _
  %s5 = ssub.s32 1, %s3
  %s6 = scalar_select 0, %s5, %s3
  $region1: #{tpu_custom_call.1} parent=0
    #allocation2 [shape = 'u8[8192]{0}', space=vmem, size = 0x2000, scoped, tag = 'input window, operand 0']
    #allocation3 [shape = 's32[2]{0}', space=sflag, size = 0x8, scoped, tag = 'scoped memory for tpu_custom_call.1']
    #allocation4 [shape = 's32[2]{0}', space=sflag, size = 0x8, scoped, tag = 'scoped memory for tpu_custom_call.1']
    #allocation5 [shape = 'u8[8192]{0}', space=vmem, size = 0x2000, scoped, tag = 'output window, operand 0']
    %7 = vsyncpa [#allocation3], 0
    %s8 = scalar_lea.sflag [#allocation3], 1
    %9 = vsyncpa %s8, 0
    %10 = vsyncpa [#allocation4], 0
    %s11 = scalar_lea.sflag [#allocation4], 1
    %12 = vsyncpa %s11, 0
    loop: start=0, step=1, limit=4
    $region2: #{tpu_custom_call.1} parent=1 // loop_pre_header
      _
    $region3: #{tpu_custom_call.1} parent=1 // loop_header
      %s14 = sphi 0, %s18
      %p15 = scmp.ge.s32.totalorder %s14, 4
      %s21 = sphi 0, %s33
      %s22 = sphi 0, %s29
      %s23 = sphi 0, %s21
      %s24 = sphi 0, %s22
      %s25 = sphi 0, %s23
      %s26 = sphi 0, %s24
      %s38 = sphi 0, %s40
      %s41 = sphi 0, %s38
      %s42 = sphi 0, %s41
      %s58 = sphi 0, %s42
      %s62 = sphi 0, %s62
      %s64 = sphi 0, %s62
      %s65 = sphi 0, %s64
      %s79 = sphi 0, %s65
      %s87 = sphi 0, %s89
      %s90 = sphi 0, %s87
      %s91 = sphi 0, %s90
      %s107 = sphi 0, %s91
    $region4: #{tpu_custom_call.1} parent=1 // loop_header_branch
      %17 = sbr.rel (%p15) target = $region8
    $region5: #{tpu_custom_call.1} parent=1 // loop_body
      %s19 = ssub.s32 %s14, 1
      %s20 = ssub.s32 %s14, 2
      %s27 = sadd.s32 1, %s22
      %p28 = scmp.ge.s32.totalorder %s27, 2
      %s29 = scalar_select %p28, 0, %s27
      %s30 = sadd.s32 1, %s21
      %s31 = scalar_select %p28, %s30, %s21
      %p32 = scmp.ge.s32.totalorder %s31, 1
      %s33 = scalar_select %p32, 0, %s31
      %s34 = ssub.s32 %s21, %s33
      %s35 = ssub.s32 %s22, %s29
      %s36 = sor.u32 %s34, %s35
      %p37 = scmp.eq.s32.totalorder %s36, 0
      %s39 = sadd.s32 %s38, 1
      %s40 = scalar_select %p37, %s38, %s39
      %p43 = pneg %p37
      %p44 = scmp.eq.s32.totalorder %s14, 1
      %p45 = por %p43, %p44
      %p46 = scmp.ne.s32.totalorder %s38, %s41
      %p47 = scmp.eq.s32.totalorder %s14, 0
      %p48 = por %p46, %p47
      %p49 = scmp.ne.s32.totalorder %s38, %s41
      %p50 = scmp.eq.s32.totalorder %s19, 1
      %p51 = por %p49, %p50
      %p52 = scmp.ne.s32.totalorder %s41, %s42
      %p53 = scmp.eq.s32.totalorder %s19, 0
      %p54 = por %p52, %p53
      %p55 = scmp.ne.s32.totalorder %s41, %s42
      %p56 = scmp.eq.s32.totalorder %s20, 1
      %p57 = por %p55, %p56
      %p59 = scmp.ne.s32.totalorder %s42, %s58
      %p60 = scmp.eq.s32.totalorder %s20, 0
      %p61 = por %p59, %p60
      %s63 = sadd.s32 %s62, 1
      %p66 = scmp.eq.s32.totalorder %s14, 1
      %p67 = scmp.ne.s32.totalorder %s62, %s64
      %p68 = scmp.eq.s32.totalorder %s14, 0
      %p69 = por %p67, %p68
      %p70 = scmp.ne.s32.totalorder %s62, %s64
      %p71 = scmp.eq.s32.totalorder %s19, 1
      %p72 = por %p70, %p71
      %p73 = scmp.ne.s32.totalorder %s64, %s65
      %p74 = scmp.eq.s32.totalorder %s19, 0
      %p75 = por %p73, %p74
      %p76 = scmp.ne.s32.totalorder %s64, %s65
      %p77 = scmp.eq.s32.totalorder %s20, 1
      %p78 = por %p76, %p77
      %p80 = scmp.ne.s32.totalorder %s65, %s79
      %p81 = scmp.eq.s32.totalorder %s20, 0
      %p82 = por %p80, %p81
      %s83 = ssub.s32 %s21, %s33
      %s84 = ssub.s32 %s22, %s29
      %s85 = sor.u32 %s83, %s84
      %p86 = scmp.eq.s32.totalorder %s85, 0
      %s88 = sadd.s32 %s87, 1
      %s89 = scalar_select %p86, %s87, %s88
      %p92 = pneg %p86
      %p93 = scmp.eq.s32.totalorder %s14, 1
      %p94 = por %p92, %p93
      %p95 = scmp.ne.s32.totalorder %s87, %s90
      %p96 = scmp.eq.s32.totalorder %s14, 0
      %p97 = por %p95, %p96
      %p98 = scmp.ne.s32.totalorder %s87, %s90
      %p99 = scmp.eq.s32.totalorder %s19, 1
      %p100 = por %p98, %p99
      %p101 = scmp.ne.s32.totalorder %s90, %s91
      %p102 = scmp.eq.s32.totalorder %s19, 0
      %p103 = por %p101, %p102
      %p104 = scmp.ne.s32.totalorder %s90, %s91
      %p105 = scmp.eq.s32.totalorder %s20, 1
      %p106 = por %p104, %p105
      %p108 = scmp.ne.s32.totalorder %s91, %s107
      %p109 = scmp.eq.s32.totalorder %s20, 0
      %p110 = por %p108, %p109
      %p111 = scmp.le.s32.totalorder 1, %s14
      %p112 = scmp.lt.s32.totalorder %s14, 3
      %p113 = pnand %p111, %p112
      %p114 = pneg %p113
      // Predicated region
      $region9: #{tpu_custom_call.1} parent=5 // pred_check
        _
      $region10: #{tpu_custom_call.1} parent=5 // pred_check_branch
        %116 = sbr.rel (%p113) target = $region12
      $region11: #{tpu_custom_call.1} parent=5 // pred_region
        %s117 = ssub.s32 %s14, 1
        // Predicated region
        $region13: #{tpu_custom_call.1} parent=11 // pred_check
          %p118 = pneg %p75
        $region14: #{tpu_custom_call.1} parent=11 // pred_check_branch
          %120 = sbr.rel (%p118) target = $region16
        $region15: #{tpu_custom_call.1} parent=11 // pred_region
          _
        $region16: #{tpu_custom_call.1} parent=11 // pred_fallthru
          _
      $region12: #{tpu_custom_call.1} parent=5 // pred_fallthru
        _
      %p121 = scmp.lt.s32.totalorder %s14, 2
      // Predicated region
      $region17: #{tpu_custom_call.1} parent=5 // pred_check
        %p122 = pneg %p121
      $region18: #{tpu_custom_call.1} parent=5 // pred_check_branch
        %124 = sbr.rel (%p122) target = $region20
      $region19: #{tpu_custom_call.1} parent=5 // pred_region
        // Predicated region
        $region21: #{tpu_custom_call.1} parent=19 // pred_check
          %p125 = pneg %p48
        $region22: #{tpu_custom_call.1} parent=19 // pred_check_branch
          %127 = sbr.rel (%p125) target = $region24
        $region23: #{tpu_custom_call.1} parent=19 // pred_region
          %s128 = sand.u32 %s38, 1
          %s129 = scalar_lea.sflag [#allocation3], %s128
          %s130 = sand.u32 %s38, 1
          %s131 = smul.addr %s130, 8
          %s132 = scalar_lea.vmem [#allocation2], %s131
          %s133 = smul.u32 2, %s21
          %s135 = ssub.s32 128, 128
          %136 = vsyncadd %s129, %s135
          %s137 = smul.addr %s133, 2
          %s138 = sadd.s32 %s22, %s137
          %s139 = smul.addr %s138, 64
          %s140 = scalar_lea.hbm %s0, %s139
          %s141 = sshll.u32 %s132, 4
          %s142 = int_to_ptr.vmem [resolvable:$true] %s141
          %147 = dma.hbm_to_vmem [thread:$0]  %s140, 128, %s142, %s129, 128, 64, 4
        $region24: #{tpu_custom_call.1} parent=19 // pred_fallthru
          _
      $region20: #{tpu_custom_call.1} parent=5 // pred_fallthru
        _
      %p148 = scmp.le.s32.totalorder 1, %s14
      %p149 = scmp.lt.s32.totalorder %s14, 3
      %p150 = pnand %p148, %p149
      %p151 = pneg %p150
      // Predicated region
      $region25: #{tpu_custom_call.1} parent=5 // pred_check
        _
      $region26: #{tpu_custom_call.1} parent=5 // pred_check_branch
        %153 = sbr.rel (%p150) target = $region28
      $region27: #{tpu_custom_call.1} parent=5 // pred_region
        %s154 = ssub.s32 %s14, 1
        %s155 = sand.u32 %s41, 1
        %s156 = scalar_lea.sflag [#allocation3], %s155
        %s157 = sand.u32 %s41, 1
        %s158 = smul.addr %s157, 8
        %s159 = scalar_lea.vmem [#allocation2], %s158
        // Predicated region
        $region29: #{tpu_custom_call.1} parent=27 // pred_check
          %p160 = pneg %p54
        $region30: #{tpu_custom_call.1} parent=27 // pred_check_branch
          %162 = sbr.rel (%p160) target = $region32
        $region31: #{tpu_custom_call.1} parent=27 // pred_region
          %163 = dma.done %s156, 128
        $region32: #{tpu_custom_call.1} parent=27 // pred_fallthru
          _
        %s164 = sand.u32 %s41, 1
        %s165 = scalar_lea.sflag [#allocation3], %s164
        %s166 = sand.u32 %s41, 1
        %s167 = smul.addr %s166, 8
        %s168 = scalar_lea.vmem [#allocation2], %s167
        %p169 = pneg %p54
        %p170 = pneg %p51
        %p171 = pneg %p75
        %p172 = pneg %p72
        %p173 = pneg %p103
        %p174 = pneg %p100
        %s175 = sand.u32 %s90, 1
        %s176 = scalar_lea.sflag [#allocation4], %s175
        %s177 = sand.u32 %s90, 1
        %s178 = smul.addr %s177, 8
        %s179 = scalar_lea.vmem [#allocation5], %s178
        %s180 = smul.u32 2, %s23
        %s181 = smul.u32 2, %s23
        %v182 = vld [vmem:[%s159] sm:$0xf]
        %v183 = vld [vmem:[%s159 + $0x4] sm:$0xf]
        %v184 = vmul.f32 %v182, %v182
        %v185 = vmul.f32 %v183, %v183
        %vm186 = vcmask 1043456
        %v187 = vsel %vm186, %v184, 0.0
        %v188 = vrot.slane %v187, 4
        %v189 = vadd.f32 %v187, %v188
        %v190 = vrot.slane %v189, 2
        %v191 = vadd.f32 %v189, %v190
        %v192 = vrot.slane %v191, 1
        %v193 = vadd.f32 %v191, %v192
        %v194 = vsel %vm186, %v185, 0.0
        %v195 = vrot.slane %v194, 4
        %v196 = vadd.f32 %v194, %v195
        %v197 = vrot.slane %v196, 2
        %v198 = vadd.f32 %v196, %v197
        %v199 = vrot.slane %v198, 1
        %v200 = vadd.f32 %v198, %v199
        %v201 = vrsqrt.pop %v193
        %v202 = vmul.f32 %v193, %v201
        %vm203 = vcmp.eq.f32.partialorder %v193, inf
        %v204 = vsel %vm203, %v193, %v202
        %vm205 = vcmp.eq.f32.partialorder %v193, 0.0
        %v206 = vand.u32 %v193, 2147483648
        %v207 = vsel %vm205, %v206, %v204
        %v208 = vrsqrt.pop %v200
        %v209 = vmul.f32 %v200, %v208
        %vm210 = vcmp.eq.f32.partialorder %v200, inf
        %v211 = vsel %vm210, %v200, %v209
        %vm212 = vcmp.eq.f32.partialorder %v200, 0.0
        %v213 = vand.u32 %v200, 2147483648
        %v214 = vsel %vm212, %v213, %v211
        %v215 = vadd.f32 %v207, 1e-10
        %v216 = vadd.f32 %v214, 1e-10
        %v217 = vrcp.pop %v215
        %v218 = vrcp.pop %v216
        %v219 = vld [vmem:[%s1] sm:$0xf]
        %v220 = vmul.f32 %v182, %v217
        %v221 = vmul.f32 %v183, %v218
        %223 = vset.pattern.permute.xlu0 0
        %224 = vperm.xlu0 %223, %v219
        %v225 = vpop.permute.xlu0 %224
        %v227 = vmul.f32 %v220, %v225
        %v228 = vmul.f32 %v221, %v225
        %229 = vst [vmem:[%s179] sm:$0xf] %v227
        %230 = vst [vmem:[%s179 + $0x4] sm:$0xf] %v228
        %s231 = sand.u32 %s90, 1
        %s232 = scalar_lea.sflag [#allocation4], %s231
        %s233 = sand.u32 %s90, 1
        %s234 = smul.addr %s233, 8
        %s235 = scalar_lea.vmem [#allocation5], %s234
        // Predicated region
        $region33: #{tpu_custom_call.1} parent=27 // pred_check
          %p236 = pneg %p100
        $region34: #{tpu_custom_call.1} parent=27 // pred_check_branch
          %238 = sbr.rel (%p236) target = $region36
        $region35: #{tpu_custom_call.1} parent=27 // pred_region
          %s239 = smul.u32 2, %s23
          %s241 = ssub.s32 128, 128
          %242 = vsyncadd %s232, %s241
          %s243 = smul.addr %s239, 2
          %s244 = sadd.s32 %s24, %s243
          %s245 = smul.addr %s244, 64
          %s246 = scalar_lea.hbm %s2, %s245
          %s247 = sshll.u32 %s235, 4
          %s248 = int_to_ptr.vmem [resolvable:$true] %s247
          %253 = dma.vmem_to_hbm [thread:$0]  %s248, 128, %s246, %s232, 64, 128, 4
        $region36: #{tpu_custom_call.1} parent=27 // pred_fallthru
          _
      $region28: #{tpu_custom_call.1} parent=5 // pred_fallthru
        _
      %p254 = scmp.le.s32.totalorder 2, %s14
      // Predicated region
      $region37: #{tpu_custom_call.1} parent=5 // pred_check
        %p255 = pneg %p254
      $region38: #{tpu_custom_call.1} parent=5 // pred_check_branch
        %257 = sbr.rel (%p255) target = $region40
      $region39: #{tpu_custom_call.1} parent=5 // pred_region
        %s258 = ssub.s32 %s14, 2
        // Predicated region
        $region41: #{tpu_custom_call.1} parent=39 // pred_check
          %p259 = pneg %p106
        $region42: #{tpu_custom_call.1} parent=39 // pred_check_branch
          %261 = sbr.rel (%p259) target = $region44
        $region43: #{tpu_custom_call.1} parent=39 // pred_region
          %s262 = sand.u32 %s91, 1
          %s263 = scalar_lea.sflag [#allocation4], %s262
          %s264 = sand.u32 %s91, 1
          %s265 = smul.addr %s264, 8
          %s266 = scalar_lea.vmem [#allocation5], %s265
          %267 = dma.done %s263, 128
        $region44: #{tpu_custom_call.1} parent=39 // pred_fallthru
          _
      $region40: #{tpu_custom_call.1} parent=5 // pred_fallthru
        _
    $region6: #{tpu_custom_call.1} parent=1 // loop_footer
      %s18 = sadd.s32 1, %s14
    $region7: #{tpu_custom_call.1} parent=1 // loop_footer_branch
      %13 = sbr.rel target = $region3
    $region8: #{tpu_custom_call.1} parent=1 // loop_exit
      _
    %268 = vsyncpa [#allocation3], 1
    %s269 = scalar_lea.sflag [#allocation3], 1
    %270 = vsyncpa %s269, 1
    %271 = vsyncpa [#allocation4], 1
    %s272 = scalar_lea.sflag [#allocation4], 1
    %273 = vsyncpa %s272, 1

</llo_original>
